<compile_context>
chip_gen: v6e
topology: v6e:2x2x1
jax: 0.10.0
libtpu: 0.0.40
codegen_flags: <defaults>
</compile_context>

<pallas_src>
import functools

import jax
import jax.numpy as jnp
from jax import lax
from jax.experimental import pallas as pl
from jax.experimental.pallas import tpu as pltpu

# ---- static model hyper-parameters (from the nn.Module definition) ----------
C_OUT = 10                                        # Conv1d out_channels
KSIZE = 2                                         # Conv1d kernel_size
STRIDE = 2                                        # Conv1d stride
PAD = 1                                           # Conv1d padding
L_IN = 8                                          # input length => flatten == 20 == fc.in_features
L_CONV = (L_IN + 2 * PAD - KSIZE) // STRIDE + 1   # = 5
L_POOL = L_CONV // 2                              # = 2 (MaxPool1d(2,2); last conv pos dropped)
FC_IN = C_OUT * L_POOL                            # = 20
L_USED = 7                                        # x[7] never reaches a surviving pool output

# ---- tiling knobs ------------------------------------------------------------
LANE = 128                 # TPU lane width
CHUNK = 1024               # in-kernel lane sub-chunk (bounds vreg pressure)
TB_MAX = 32 * 1024         # max lanes per grid step (7 * 32K * 4 B ~= 0.9 MiB input block)
MIN_STEPS = 4              # target grid steps for large B (pipelining + 2 TCs on v7x)


def _round_up(n, m):
    return ((n + m - 1) // m) * m


def _cdiv(n, m):
    return -(-n // m)


def _pick_tiles(batch):
    """Choose (padded batch, lane tile, in-kernel chunk, grid steps)."""
    b_pad = _round_up(max(int(batch), 1), LANE)        # pad batch to ONE lane group only
    tb = _round_up(_cdiv(b_pad, MIN_STEPS), LANE)      # aim for >= MIN_STEPS grid steps
    tb = max(LANE, min(TB_MAX, tb))
    if tb > CHUNK:                                     # keep the in-kernel chunk a divisor of tb
        tb = min(_round_up(tb, CHUNK), TB_MAX)
    chunk = tb if tb <= CHUNK else CHUNK
    n_steps = _cdiv(b_pad, tb)                         # last block may be partial (masked writes)
    return b_pad, tb, chunk, n_steps


def net_kernel(w_ref, x_ref, o_ref, *, chunk):
    """Fused Conv1d(1,10,2,2,1) + MaxPool1d(2,2) + Linear(20,1) on one batch tile.

    w_ref : VMEM (10, 8)  packed params: [:,0]=conv tap0, [:,1]=conv tap1,
                          [:,2]=fc weight (pool j=0), [:,3]=fc weight (pool j=1),
                          [:,4]=folded total bias in row 0 (rest zero), [:,5:]=0
    x_ref : VMEM (7, tb)  rows = input positions 0..6, lanes = batch
    o_ref : VMEM (1, tb)  lane-dense output
    """
    wp = w_ref[...]                                   # (10, 8), resident block
    w0, w1 = wp[:, 0:1], wp[:, 1:2]                   # (10, 1) conv taps
    fwe, fwo = wp[:, 2:3], wp[:, 3:4]                 # (10, 1) fc weights (flatten 2c / 2c+1)
    bcol = wp[:, 4:5]                                 # (10, 1) folded bias (row 0 only)

    n_chunks = x_ref.shape[-1] // chunk

    def body(j, carry):
        off = pl.multiple_of(j * chunk, chunk)
        x = x_ref[:, pl.ds(off, chunk)]               # (7, chunk), batch on lanes
        # Conv positions surviving MaxPool1d(2,2); the left pad tap of t=0 is
        # algebraically zero, so t=0 only uses the second tap.
        p0 = jnp.maximum(w1 * x[0:1],
                         w0 * x[1:2] + w1 * x[2:3])   # (10, chunk)  max(t0, t1)
        p1 = jnp.maximum(w0 * x[3:4] + w1 * x[4:5],
                         w0 * x[5:6] + w1 * x[6:7])   # (10, chunk)  max(t2, t3)
        # Linear(20, 1): NCL flatten => feature 2c+j; conv/fc biases pre-folded.
        z = fwe * p0 + fwo * p1 + bcol                # (10, chunk)
        o_ref[:, pl.ds(off, chunk)] = (
            jnp.sum(z, axis=0, keepdims=True).astype(o_ref.dtype))
        return carry

    lax.fori_loop(0, n_chunks, body, 0, unroll=True)


@jax.jit
def net_forward(x, conv_w, conv_b, fc_w, fc_b):
    """x: (B, 1, L_IN) NCL float.  Returns (B, 1) float32 (same as PyTorch Net)."""
    B = x.shape[0]
    assert x.shape == (B, 1, L_IN), x.shape

    # ---- tiny parameter prep: one (10, 8) packed block -----------------------
    fw = fc_w.reshape(FC_IN).astype(jnp.float32)                  # (20,)
    cb = conv_b.astype(jnp.float32)                               # (10,)
    # max(a+b, c+b) = max(a, c) + b  =>  fold conv bias through pool into fc:
    bias_total = fc_b.astype(jnp.float32)[0] + jnp.sum(cb * (fw[0::2] + fw[1::2]))
    wpack = jnp.zeros((C_OUT, 8), jnp.float32)
    wpack = wpack.at[:, 0].set(conv_w[:, 0, 0].astype(jnp.float32))
    wpack = wpack.at[:, 1].set(conv_w[:, 0, 1].astype(jnp.float32))
    wpack = wpack.at[:, 2].set(fw[0::2])
    wpack = wpack.at[:, 3].set(fw[1::2])
    wpack = wpack.at[0, 4].set(bias_total)

    # ---- layout plumbing: batch on lanes --------------------------------------
    b_pad, tb, chunk, n_steps = _pick_tiles(B)
    assert tb % LANE == 0 and tb % chunk == 0
    # slice(unused row) + transpose + cast + pad fuse into one XLA copy pass.
    xt = jnp.pad(jnp.transpose(x[:, 0, :L_USED]).astype(jnp.float32),
                 ((0, 0), (0, b_pad - B)))                        # (7, b_pad)

    out = pl.pallas_call(
        functools.partial(net_kernel, chunk=chunk),
        out_shape=jax.ShapeDtypeStruct((1, b_pad), jnp.float32),
        grid=(n_steps,),
        in_specs=[
            pl.BlockSpec((C_OUT, 8), lambda i: (0, 0)),           # packed params (resident)
            pl.BlockSpec((L_USED, tb), lambda i: (0, i)),         # input tile, batch on lanes
        ],
        out_specs=pl.BlockSpec((1, tb), lambda i: (0, i)),        # lane-dense output tile
        compiler_params=pltpu.CompilerParams(
            dimension_semantics=("parallel",),                    # shard batch across v7x's 2 TCs
            vmem_limit_bytes=32 * 1024 * 1024,                    # explicit; ~3 MiB actually used
        ),
    )(wpack, xt)

    return jnp.transpose(out[:, :B])                              # (B, 1)


def ref_forward(x, conv_w, conv_b, fc_w, fc_b):
    """Pure-JAX reference mirroring the PyTorch module (exact f32, no matmuls)."""
    B = x.shape[0]
    xp = jnp.pad(x[:, 0, :].astype(jnp.float32), ((0, 0), (PAD, PAD)))     # (B, L_IN+2)
    y = jnp.stack(
        [xp[:, None, STRIDE * t] * conv_w[None, :, 0, 0]
         + xp[:, None, STRIDE * t + 1] * conv_w[None, :, 0, 1]
         for t in range(L_CONV)],
        axis=-1,
    ) + conv_b[None, :, None]                                              # (B, 10, 5)
    p = jnp.maximum(y[:, :, 0:2 * L_POOL:2], y[:, :, 1:2 * L_POOL:2])      # (B, 10, 2)
    flat = p.reshape(B, FC_IN)                                             # NCL flatten order
    return jnp.sum(flat * fc_w[0][None, :], axis=-1, keepdims=True) + fc_b[None, :]


if __name__ == "__main__":
    key = jax.random.PRNGKey(0)
    k_x, k_x2, k_cw, k_cb, k_fw, k_fb = jax.random.split(key, 6)

    # Deterministic synthetic parameters (shapes from Net.__init__).
    conv_w = jax.random.normal(k_cw, (C_OUT, 1, KSIZE), dtype=jnp.float32) * 0.5
    conv_b = jax.random.normal(k_cb, (C_OUT,), dtype=jnp.float32) * 0.1
    fc_w = jax.random.normal(k_fw, (1, FC_IN), dtype=jnp.float32) * 0.2
    fc_b = jax.random.normal(k_fb, (1,), dtype=jnp.float32) * 0.1

    # Small shape implied by the module: batch=2, channels=1, length=8.
    x = jax.random.normal(k_x, (2, 1, L_IN), dtype=jnp.float32)
    out = jax.block_until_ready(net_forward(x, conv_w, conv_b, fc_w, fc_b))
    ref = ref_forward(x, conv_w, conv_b, fc_w, fc_b)
    assert out.shape == (2, 1)
    assert jnp.allclose(out, ref, atol=1e-5, rtol=1e-5), (out, ref)

    # Secondary check exercising the multi-step grid, the in-kernel chunk loop
    # and a partial (masked) last block.
    x2 = jax.random.normal(k_x2, (4500, 1, L_IN), dtype=jnp.float32)
    out2 = jax.block_until_ready(net_forward(x2, conv_w, conv_b, fc_w, fc_b))
    ref2 = ref_forward(x2, conv_w, conv_b, fc_w, fc_b)
    assert out2.shape == (4500, 1)
    assert jnp.allclose(out2, ref2, atol=1e-5, rtol=1e-5)

    print("KERNEL_OK")
</pallas_src>

<mosaic_0001>
module attributes {stable_mosaic.version = 11 : i64} {
  func.func @net_kernel(%arg0: i32, %arg1: memref<10x8xf32, #tpu.memory_space<vmem>>, %arg2: memref<7x128xf32, #tpu.memory_space<vmem>>, %arg3: memref<1x128xf32, #tpu.memory_space<vmem>>) attributes {dimension_semantics = [#tpu.dimension_semantics<parallel>], iteration_bounds = array<i64: 1>, scalar_prefetch = 0 : i64, scratch_operands = 0 : i64, tpu.core_type = #tpu.core_type<tc>, window_params = [{pipeline_mode = #tpu.pipeline_mode<synchronous>, transform_indices = @transform_0, window_bounds = array<i64: 10, 8>}, {transform_indices = @transform_1, window_bounds = array<i64: 7, 128>}, {transform_indices = @transform_2, window_bounds = array<i64: 1, 128>}]} {
    %c0 = arith.constant 0 : index
    %c0_0 = arith.constant 0 : index
    %0 = vector.load %arg1[%c0, %c0_0] : memref<10x8xf32, #tpu.memory_space<vmem>>, vector<10x8xf32>
    %1 = vector.extract_strided_slice %0 {offsets = [0, 0], sizes = [10, 1], strides = [1, 1]} : vector<10x8xf32> to vector<10x1xf32>
    %2 = vector.extract_strided_slice %0 {offsets = [0, 1], sizes = [10, 1], strides = [1, 1]} : vector<10x8xf32> to vector<10x1xf32>
    %3 = vector.extract_strided_slice %0 {offsets = [0, 2], sizes = [10, 1], strides = [1, 1]} : vector<10x8xf32> to vector<10x1xf32>
    %4 = vector.extract_strided_slice %0 {offsets = [0, 3], sizes = [10, 1], strides = [1, 1]} : vector<10x8xf32> to vector<10x1xf32>
    %5 = vector.extract_strided_slice %0 {offsets = [0, 4], sizes = [10, 1], strides = [1, 1]} : vector<10x8xf32> to vector<10x1xf32>
    %c0_i32 = arith.constant 0 : i32
    %c128_i32 = arith.constant 128 : i32
    %6 = arith.muli %c0_i32, %c128_i32 : i32
    %7 = tpu.assume_multiple %6, 128 : i32
    %c0_1 = arith.constant 0 : index
    %8 = arith.index_cast %7 : i32 to index
    %9 = vector.load %arg2[%c0_1, %8] : memref<7x128xf32, #tpu.memory_space<vmem>>, vector<7x128xf32>
    %10 = vector.extract_strided_slice %9 {offsets = [0, 0], sizes = [1, 128], strides = [1, 1]} : vector<7x128xf32> to vector<1x128xf32>
    %11 = vector.broadcast %2 : vector<10x1xf32> to vector<10x128xf32>
    %12 = vector.broadcast %10 : vector<1x128xf32> to vector<10x128xf32>
    %13 = arith.mulf %11, %12 : vector<10x128xf32>
    %14 = vector.extract_strided_slice %9 {offsets = [1, 0], sizes = [1, 128], strides = [1, 1]} : vector<7x128xf32> to vector<1x128xf32>
    %15 = vector.broadcast %1 : vector<10x1xf32> to vector<10x128xf32>
    %16 = vector.broadcast %14 : vector<1x128xf32> to vector<10x128xf32>
    %17 = arith.mulf %15, %16 : vector<10x128xf32>
    %18 = vector.extract_strided_slice %9 {offsets = [2, 0], sizes = [1, 128], strides = [1, 1]} : vector<7x128xf32> to vector<1x128xf32>
    %19 = vector.broadcast %2 : vector<10x1xf32> to vector<10x128xf32>
    %20 = vector.broadcast %18 : vector<1x128xf32> to vector<10x128xf32>
    %21 = arith.mulf %19, %20 : vector<10x128xf32>
    %22 = arith.addf %17, %21 : vector<10x128xf32>
    %23 = arith.maximumf %13, %22 : vector<10x128xf32>
    %24 = vector.extract_strided_slice %9 {offsets = [3, 0], sizes = [1, 128], strides = [1, 1]} : vector<7x128xf32> to vector<1x128xf32>
    %25 = vector.broadcast %1 : vector<10x1xf32> to vector<10x128xf32>
    %26 = vector.broadcast %24 : vector<1x128xf32> to vector<10x128xf32>
    %27 = arith.mulf %25, %26 : vector<10x128xf32>
    %28 = vector.extract_strided_slice %9 {offsets = [4, 0], sizes = [1, 128], strides = [1, 1]} : vector<7x128xf32> to vector<1x128xf32>
    %29 = vector.broadcast %2 : vector<10x1xf32> to vector<10x128xf32>
    %30 = vector.broadcast %28 : vector<1x128xf32> to vector<10x128xf32>
    %31 = arith.mulf %29, %30 : vector<10x128xf32>
    %32 = arith.addf %27, %31 : vector<10x128xf32>
    %33 = vector.extract_strided_slice %9 {offsets = [5, 0], sizes = [1, 128], strides = [1, 1]} : vector<7x128xf32> to vector<1x128xf32>
    %34 = vector.broadcast %1 : vector<10x1xf32> to vector<10x128xf32>
    %35 = vector.broadcast %33 : vector<1x128xf32> to vector<10x128xf32>
    %36 = arith.mulf %34, %35 : vector<10x128xf32>
    %37 = vector.extract_strided_slice %9 {offsets = [6, 0], sizes = [1, 128], strides = [1, 1]} : vector<7x128xf32> to vector<1x128xf32>
    %38 = vector.broadcast %2 : vector<10x1xf32> to vector<10x128xf32>
    %39 = vector.broadcast %37 : vector<1x128xf32> to vector<10x128xf32>
    %40 = arith.mulf %38, %39 : vector<10x128xf32>
    %41 = arith.addf %36, %40 : vector<10x128xf32>
    %42 = arith.maximumf %32, %41 : vector<10x128xf32>
    %43 = vector.broadcast %3 : vector<10x1xf32> to vector<10x128xf32>
    %44 = arith.mulf %43, %23 : vector<10x128xf32>
    %45 = vector.broadcast %4 : vector<10x1xf32> to vector<10x128xf32>
    %46 = arith.mulf %45, %42 : vector<10x128xf32>
    %47 = arith.addf %44, %46 : vector<10x128xf32>
    %48 = vector.broadcast %5 : vector<10x1xf32> to vector<10x128xf32>
    %49 = arith.addf %47, %48 : vector<10x128xf32>
    %cst = arith.constant dense<0.000000e+00> : vector<128xf32>
    %50 = vector.multi_reduction <add>, %49, %cst [0] : vector<10x128xf32> to vector<128xf32>
    %51 = vector.shape_cast %50 : vector<128xf32> to vector<1x128xf32>
    %c0_2 = arith.constant 0 : index
    %52 = arith.index_cast %7 : i32 to index
    %53 = vector.load %arg3[%c0_2, %52] : memref<1x128xf32, #tpu.memory_space<vmem>>, vector<1x128xf32>
    tpu.vector_store %arg3[%c0_2, %52], %51 {strides = array<i32>} : memref<1x128xf32, #tpu.memory_space<vmem>>, vector<1x128xf32>,
    %c1_i32 = arith.constant 1 : i32
    return
  }
  func.func @transform_0(%arg0: i32) -> (i32, i32) {
    %c0_i32 = arith.constant 0 : i32
    %c0_i32_0 = arith.constant 0 : i32
    %c0_i32_1 = arith.constant 0 : i32
    return %c0_i32, %c0_i32_0 : i32, i32
  }
  func.func @transform_1(%arg0: i32) -> (i32, i32) {
    %c0_i32 = arith.constant 0 : i32
    %c0_i32_0 = arith.constant 0 : i32
    return %c0_i32, %arg0 : i32, i32
  }
  func.func @transform_2(%arg0: i32) -> (i32, i32) {
    %c0_i32 = arith.constant 0 : i32
    %c0_i32_0 = arith.constant 0 : i32
    return %c0_i32, %arg0 : i32, i32
  }
}

</mosaic_0001>

<llo_original>
// kernel: net_forward.1
$region0: #{net_forward.1}
  #allocation0 [shape = 'u32[]', space=smem, size = 0x4, offset = 0x4, fixed_abs, tag = 'smem constant byte address 0x4 - core index']
  #allocation1 [shape = 'u32[144,128]{1,0:T(1,128)}', space=vmem, size = 0x12000, scoped, tag = 'internal scratch']
  %s0 = inlined_call_operand.vmem [shape: f32[10,8], index: 0, kind: input, shape index: {}]
  %s1 = inlined_call_operand.vmem [shape: f32[7,128], index: 1, kind: input, shape index: {}]
  %s2 = inlined_call_operand.vmem [shape: f32[1,128], index: 2, kind: output, shape index: {}]
  %s3 = sld [smem:[#allocation0]]
  $region18: #{net_forward.1} parent=0
    _
  %s5 = ssub.s32 1, %s3
  %s6 = scalar_select 0, %s5, %s3
  // Predicated region
  $region2: #{net_forward.1} parent=0 // pred_check
    _
  $region3: #{net_forward.1} parent=0 // pred_check_branch
    %8 = sbr.rel (0) target = $region5
  $region4: #{net_forward.1} parent=0 // pred_region
    _
  $region5: #{net_forward.1} parent=0 // pred_fallthru
    _
  // Predicated region
  $region6: #{net_forward.1} parent=0 // pred_check
    _
  $region7: #{net_forward.1} parent=0 // pred_check_branch
    %10 = sbr.rel (0) target = $region9
  $region8: #{net_forward.1} parent=0 // pred_region
    _
  $region9: #{net_forward.1} parent=0 // pred_fallthru
    _
  %v11 = vld [vmem:[%s0] sm:$0xff]
  %v12 = vld [vmem:[%s0 + $0x8] sm:$0x3]
  %v13 = vld [vmem:[%s1] sm:$0x7f]
  %15 = vset.pattern.permute.xlu0 1
  %16 = vperm.xlu0 %15, %v11
  %v17 = vpop.permute.xlu0 %16
  %20 = vset.pattern.permute.xlu0 1
  %21 = vperm.xlu0 %20, %v12
  %v22 = vpop.permute.xlu0 %21
  %v24 = vlaneseq
  %v25 = vshrl.u32 %v24, 7
  %v26 = vsub.s32 0, %v25
  %v27 = vrot.slane %v13, %v26
  %v28 = vmul.f32 %v17, %v27
  %v29 = vmul.f32 %v22, %v27
  %30 = vset.pattern.permute.xlu0 0
  %31 = vperm.xlu0 %30, %v11
  %v32 = vpop.permute.xlu0 %31
  %34 = vset.pattern.permute.xlu0 0
  %35 = vperm.xlu0 %34, %v12
  %v36 = vpop.permute.xlu0 %35
  %v38 = vlaneseq
  %v39 = vshrl.u32 %v38, 7
  %v40 = vsub.s32 1, %v39
  %v41 = vrot.slane %v13, %v40
  %v42 = vmul.f32 %v32, %v41
  %v43 = vmul.f32 %v36, %v41
  %v44 = vlaneseq
  %v45 = vshrl.u32 %v44, 7
  %v46 = vsub.s32 2, %v45
  %v47 = vrot.slane %v13, %v46
  %v48 = vmul.f32 %v17, %v47
  %v49 = vmul.f32 %v22, %v47
  %v50 = vadd.f32 %v42, %v48
  %v51 = vadd.f32 %v43, %v49
  %v52 = vmax.f32 %v28, %v50
  %v53 = vmax.f32 %v29, %v51
  %v54 = vlaneseq
  %v55 = vshrl.u32 %v54, 7
  %v56 = vsub.s32 3, %v55
  %v57 = vrot.slane %v13, %v56
  %v58 = vmul.f32 %v32, %v57
  %v59 = vmul.f32 %v36, %v57
  %v60 = vlaneseq
  %v61 = vshrl.u32 %v60, 7
  %v62 = vsub.s32 4, %v61
  %v63 = vrot.slane %v13, %v62
  %v64 = vmul.f32 %v17, %v63
  %v65 = vmul.f32 %v22, %v63
  %v66 = vadd.f32 %v58, %v64
  %v67 = vadd.f32 %v59, %v65
  %v68 = vlaneseq
  %v69 = vshrl.u32 %v68, 7
  %v70 = vsub.s32 5, %v69
  %v71 = vrot.slane %v13, %v70
  %v72 = vmul.f32 %v32, %v71
  %v73 = vmul.f32 %v36, %v71
  %v74 = vlaneseq
  %v75 = vshrl.u32 %v74, 7
  %v76 = vsub.s32 6, %v75
  %v77 = vrot.slane %v13, %v76
  %v78 = vmul.f32 %v17, %v77
  %v79 = vmul.f32 %v22, %v77
  %v80 = vadd.f32 %v72, %v78
  %v81 = vadd.f32 %v73, %v79
  %v82 = vmax.f32 %v66, %v80
  %v83 = vmax.f32 %v67, %v81
  %84 = vset.pattern.permute.xlu0 2
  %85 = vperm.xlu0 %84, %v11
  %v86 = vpop.permute.xlu0 %85
  %88 = vset.pattern.permute.xlu0 2
  %89 = vperm.xlu0 %88, %v12
  %v90 = vpop.permute.xlu0 %89
  %v92 = vmul.f32 %v86, %v52
  %v93 = vmul.f32 %v90, %v53
  %94 = vset.pattern.permute.xlu0 3
  %95 = vperm.xlu0 %94, %v11
  %v96 = vpop.permute.xlu0 %95
  %98 = vset.pattern.permute.xlu0 3
  %99 = vperm.xlu0 %98, %v12
  %v100 = vpop.permute.xlu0 %99
  %v102 = vmul.f32 %v96, %v82
  %v103 = vmul.f32 %v100, %v83
  %v104 = vadd.f32 %v92, %v102
  %v105 = vadd.f32 %v93, %v103
  %106 = vset.pattern.permute.xlu0 4
  %107 = vperm.xlu0 %106, %v11
  %v108 = vpop.permute.xlu0 %107
  %110 = vset.pattern.permute.xlu0 4
  %111 = vperm.xlu0 %110, %v12
  %v112 = vpop.permute.xlu0 %111
  %v114 = vadd.f32 %v104, %v108
  %v115 = vadd.f32 %v105, %v112
  %vm116 = vcmask 1041408
  %v117 = vsel %vm116, %v115, 0.0
  %v118 = vadd.f32 %v114, %v117
  %v119 = vrot.slane %v118, 4
  %v120 = vadd.f32 %v118, %v119
  %v121 = vrot.slane %v120, 2
  %v122 = vadd.f32 %v120, %v121
  %v123 = vrot.slane %v122, 1
  %v124 = vadd.f32 %v122, %v123
  %125 = vst [vmem:[%s2] sm:$0x1] %v124
  // Predicated region
  $region10: #{net_forward.1} parent=0 // pred_check
    _
  $region11: #{net_forward.1} parent=0 // pred_check_branch
    %127 = sbr.rel (0) target = $region13
  $region12: #{net_forward.1} parent=0 // pred_region
    _
  $region13: #{net_forward.1} parent=0 // pred_fallthru
    _
  // Predicated region
  $region14: #{net_forward.1} parent=0 // pred_check
    _
  $region15: #{net_forward.1} parent=0 // pred_check_branch
    %129 = sbr.rel (0) target = $region17
  $region16: #{net_forward.1} parent=0 // pred_region
    _
  $region17: #{net_forward.1} parent=0 // pred_fallthru
    _

</llo_original>
